<compile_context>
chip_gen: v7x
topology: tpu7x:2x2x1
jax: 0.10.0
libtpu: 0.0.40
codegen_flags: <defaults>
</compile_context>

<pallas_src>
import jax
import jax.numpy as jnp
from jax.experimental import pallas as pl
from jax.experimental.pallas import tpu as pltpu


def _round_up(n, m):
    return ((n + m - 1) // m) * m


def _mlp_kernel(x_ref, w1_ref, b1_ref, w2_ref, b2_ref, w3_ref, b3_ref, o_ref):
    # Layer 1: Linear + ReLU.  MXU operands in the weights' dtype (bf16 by
    # default), f32 accumulation; bias add / ReLU epilogue in f32.
    x = x_ref[...]
    if x.dtype != w1_ref.dtype:
        x = x.astype(w1_ref.dtype)
    h1 = jnp.dot(x, w1_ref[...], preferred_element_type=jnp.float32)
    h1 = jnp.maximum(h1 + b1_ref[...], 0.0)

    # Layer 2: Linear + ReLU.
    h2 = jnp.dot(h1.astype(w2_ref.dtype), w2_ref[...],
                 preferred_element_type=jnp.float32)
    h2 = jnp.maximum(h2 + b2_ref[...], 0.0)

    # Output layer: Linear (no activation). Store directly in the final dtype.
    y = jnp.dot(h2.astype(w3_ref.dtype), w3_ref[...],
                preferred_element_type=jnp.float32)
    o_ref[...] = (y + b3_ref[...]).astype(o_ref.dtype)


def cls_mlp_forward(x, params, out_dim, *, tile_m=512):
    """Forward pass of CLS_MLP.

    x:       any shape with leading batch dim; flattened to (B, input_dim).
    params:  (w1, b1, w2, b2, w3, b3) from init_params -- weights already in
             the compute dtype (bf16 by default), biases f32, feature dims
             lane-padded (K->128k, 500->512, 100->128, output_dim->128k).
    out_dim: logical (unpadded) output dimension.
    """
    w1, b1, w2, b2, w3, b3 = params
    b = x.shape[0]
    x2d = x.reshape(b, -1)

    in_pad = w1.shape[0]
    out_pad = w3.shape[1]
    assert x2d.shape[1] <= in_pad, "flattened input dim exceeds padded weights"
    if x2d.shape[1] != in_pad:
        # K padding: padded W1 rows are zero, so padded x columns are inert.
        x2d = jnp.pad(x2d, ((0, 0), (0, in_pad - x2d.shape[1])))

    compute_dtype = w1.dtype
    out_dtype = x.dtype

    # Batch tiling. bf16 packs two rows per sublane -> 16-aligned M.
    align = 16 if (compute_dtype == jnp.bfloat16 or x2d.dtype == jnp.bfloat16) else 8
    tm = min(tile_m, _round_up(b, align))
    # v7x megacore: prefer >= 2 grid steps when the batch allows it, so the
    # "parallel" axis actually shards across both TensorCores.
    if b > align and _round_up(b, tm) // tm < 2:
        tm = _round_up(-(-b // 2), align)
    b_pad = _round_up(b, tm)
    if b_pad != b:
        x2d = jnp.pad(x2d, ((0, b_pad - b), (0, 0)))
    grid = (b_pad // tm,)

    # x / output march over the batch; weights & biases have constant block
    # indices and are single-buffered (resident in VMEM for the whole grid).
    x_spec = pl.BlockSpec((tm, in_pad), lambda i: (i, 0))
    o_spec = pl.BlockSpec((tm, out_pad), lambda i: (i, 0))

    def resident(arr):
        return pl.BlockSpec(arr.shape, lambda i: (0, 0),
                            pipeline_mode=pl.Buffered(1))

    itemsize = lambda a: jnp.dtype(a.dtype).itemsize
    weight_bytes = sum(p.size * itemsize(p) for p in (w1, b1, w2, b2, w3, b3))
    x_tile_bytes = tm * in_pad * itemsize(x2d)
    o_tile_bytes = tm * out_pad * jnp.dtype(out_dtype).itemsize
    act_bytes = tm * (w1.shape[1] + w2.shape[1]) * 4  # f32 h1/h2 temporaries
    vmem_est = 2 * (x_tile_bytes + o_tile_bytes) + weight_bytes + act_bytes
    # Generous headroom, floored at 16 MiB, capped at 48 MiB (v7x-safe).
    vmem_limit = int(min(max(vmem_est * 1.5 + (4 << 20), 16 << 20), 48 << 20))

    flops = 2 * b_pad * (in_pad * w1.shape[1]
                         + w2.shape[0] * w2.shape[1]
                         + w3.shape[0] * w3.shape[1])
    bytes_accessed = (x2d.size * itemsize(x2d) + weight_bytes
                      + b_pad * out_pad * jnp.dtype(out_dtype).itemsize)
    cost = pl.CostEstimate(flops=flops, transcendentals=0,
                           bytes_accessed=bytes_accessed)

    out = pl.pallas_call(
        _mlp_kernel,
        out_shape=jax.ShapeDtypeStruct((b_pad, out_pad), out_dtype),
        grid=grid,
        in_specs=[
            x_spec,
            resident(w1), resident(b1),
            resident(w2), resident(b2),
            resident(w3), resident(b3),
        ],
        out_specs=o_spec,
        compiler_params=pltpu.CompilerParams(
            dimension_semantics=("parallel",),
            vmem_limit_bytes=vmem_limit),
        cost_estimate=cost,
    )(x2d, w1, b1, w2, b2, w3, b3)

    # Slice away batch padding and lane padding of the output.
    return out[:b, :out_dim]


def init_params(key, input_dim, output_dim, *, param_dtype=jnp.bfloat16):
    """nn.Linear-style uniform(-1/sqrt(fan_in), +1/sqrt(fan_in)) init.

    Weights are zero-padded to lane multiples (K->128k, 500->512, 100->128,
    output_dim->128k) and cast ONCE to `param_dtype` (bf16 default) so the
    kernel's weight DMA is already halved; biases stay f32 (f32 epilogue).
    Padded rows/cols are zero and ReLU(0)=0, so results for the valid output
    columns are unaffected by padding.
    """
    in_pad = _round_up(input_dim, 128)
    out_pad = _round_up(output_dim, 128)
    logical = [(input_dim, 500), (500, 100), (100, output_dim)]
    padded = [(in_pad, 512), (512, 128), (128, out_pad)]
    params = []
    for (fan_in, fan_out), (pin, pout) in zip(logical, padded):
        key, kw, kb = jax.random.split(key, 3)
        bound = 1.0 / (float(fan_in) ** 0.5)
        w = jax.random.uniform(kw, (fan_in, fan_out), jnp.float32, -bound, bound)
        bvec = jax.random.uniform(kb, (1, fan_out), jnp.float32, -bound, bound)
        w = jnp.pad(w, ((0, pin - fan_in), (0, pout - fan_out))).astype(param_dtype)
        bvec = jnp.pad(bvec, ((0, 0), (0, pout - fan_out)))  # f32 bias
        params.extend([w, bvec])
    return tuple(params)


def reference_forward(x, params, out_dim):
    """Pure-JAX f32 reference using the same (padded) parameters."""
    b = x.shape[0]
    x2d = x.reshape(b, -1).astype(jnp.float32)
    w1, b1, w2, b2, w3, b3 = [p.astype(jnp.float32) for p in params]
    if x2d.shape[1] != w1.shape[0]:
        x2d = jnp.pad(x2d, ((0, 0), (0, w1.shape[0] - x2d.shape[1])))
    h1 = jnp.maximum(x2d @ w1 + b1, 0.0)
    h2 = jnp.maximum(h1 @ w2 + b2, 0.0)
    return (h2 @ w3 + b3)[:, :out_dim]


if __name__ == "__main__":
    key = jax.random.PRNGKey(0)
    kx, kp = jax.random.split(key)

    batch, chw, output_dim = 8, (4, 4, 4), 10
    input_dim = chw[0] * chw[1] * chw[2]  # 64 -> K padded to 128
    x = jax.random.normal(kx, (batch,) + chw, jnp.float32)

    # f32-operand path: must match the pure-JAX reference tightly.
    params_f32 = init_params(kp, input_dim, output_dim, param_dtype=jnp.float32)
    y_ref = reference_forward(x, params_f32, output_dim)
    y_f32 = jax.block_until_ready(cls_mlp_forward(x, params_f32, output_dim))
    assert y_f32.shape == (batch, output_dim)
    assert jnp.allclose(y_f32, y_ref, atol=1e-4, rtol=1e-4)

    # Default bf16 MXU-operand path (f32 accumulation) -- looser tolerance.
    params_bf16 = init_params(kp, input_dim, output_dim)  # bf16 by default
    y_bf16 = jax.block_until_ready(cls_mlp_forward(x, params_bf16, output_dim))
    assert y_bf16.shape == (batch, output_dim)
    assert jnp.allclose(y_bf16.astype(jnp.float32), y_ref, atol=5e-2, rtol=5e-2)

    print("KERNEL_OK")
</pallas_src>

<mosaic_0001>
module attributes {stable_mosaic.version = 11 : i64} {
  func.func @_mlp_kernel(%arg0: i32, %arg1: memref<8x128xf32, #tpu.memory_space<vmem>>, %arg2: memref<128x512xf32, #tpu.memory_space<vmem>>, %arg3: memref<1x512xf32, #tpu.memory_space<vmem>>, %arg4: memref<512x128xf32, #tpu.memory_space<vmem>>, %arg5: memref<1x128xf32, #tpu.memory_space<vmem>>, %arg6: memref<128x128xf32, #tpu.memory_space<vmem>>, %arg7: memref<1x128xf32, #tpu.memory_space<vmem>>, %arg8: memref<8x128xf32, #tpu.memory_space<vmem>>) attributes {dimension_semantics = [#tpu.dimension_semantics<parallel>], iteration_bounds = array<i64: 1>, scalar_prefetch = 0 : i64, scratch_operands = 0 : i64, tpu.core_type = #tpu.core_type<tc>, window_params = [{transform_indices = @transform_0, window_bounds = array<i64: 8, 128>}, {pipeline_mode = #tpu.pipeline_mode<synchronous>, transform_indices = @transform_1, window_bounds = array<i64: 128, 512>}, {pipeline_mode = #tpu.pipeline_mode<synchronous>, transform_indices = @transform_2, window_bounds = array<i64: 1, 512>}, {pipeline_mode = #tpu.pipeline_mode<synchronous>, transform_indices = @transform_3, window_bounds = array<i64: 512, 128>}, {pipeline_mode = #tpu.pipeline_mode<synchronous>, transform_indices = @transform_4, window_bounds = array<i64: 1, 128>}, {pipeline_mode = #tpu.pipeline_mode<synchronous>, transform_indices = @transform_5, window_bounds = array<i64: 128, 128>}, {pipeline_mode = #tpu.pipeline_mode<synchronous>, transform_indices = @transform_6, window_bounds = array<i64: 1, 128>}, {transform_indices = @transform_7, window_bounds = array<i64: 8, 128>}]} {
    %c0 = arith.constant 0 : index
    %c0_0 = arith.constant 0 : index
    %0 = vector.load %arg1[%c0, %c0_0] : memref<8x128xf32, #tpu.memory_space<vmem>>, vector<8x128xf32>
    %c0_1 = arith.constant 0 : index
    %c0_2 = arith.constant 0 : index
    %1 = vector.load %arg2[%c0_1, %c0_2] : memref<128x512xf32, #tpu.memory_space<vmem>>, vector<128x512xf32>
    %cst = arith.constant dense<0.000000e+00> : vector<8x512xf32>
    %2 = tpu.matmul %0, %1, %cst {dimension_numbers = #tpu.dot_dimension_numbers<[1], [0], [0], [1], [0, 0, 1, 1], [], []>} : vector<8x128xf32>, vector<128x512xf32>, vector<8x512xf32> -> vector<8x512xf32>
    %c0_3 = arith.constant 0 : index
    %c0_4 = arith.constant 0 : index
    %3 = vector.load %arg3[%c0_3, %c0_4] : memref<1x512xf32, #tpu.memory_space<vmem>>, vector<1x512xf32>
    %4 = vector.broadcast %3 : vector<1x512xf32> to vector<8x512xf32>
    %5 = arith.addf %2, %4 : vector<8x512xf32>
    %cst_5 = arith.constant 0.000000e+00 : f32
    %6 = vector.broadcast %cst_5 : f32 to vector<8x512xf32>
    %7 = arith.maximumf %5, %6 : vector<8x512xf32>
    %c0_6 = arith.constant 0 : index
    %c0_7 = arith.constant 0 : index
    %8 = vector.load %arg4[%c0_6, %c0_7] : memref<512x128xf32, #tpu.memory_space<vmem>>, vector<512x128xf32>
    %cst_8 = arith.constant dense<0.000000e+00> : vector<8x128xf32>
    %9 = tpu.matmul %7, %8, %cst_8 {dimension_numbers = #tpu.dot_dimension_numbers<[1], [0], [0], [1], [0, 0, 1, 1], [], []>} : vector<8x512xf32>, vector<512x128xf32>, vector<8x128xf32> -> vector<8x128xf32>
    %c0_9 = arith.constant 0 : index
    %c0_10 = arith.constant 0 : index
    %10 = vector.load %arg5[%c0_9, %c0_10] : memref<1x128xf32, #tpu.memory_space<vmem>>, vector<1x128xf32>
    %11 = vector.broadcast %10 : vector<1x128xf32> to vector<8x128xf32>
    %12 = arith.addf %9, %11 : vector<8x128xf32>
    %cst_11 = arith.constant 0.000000e+00 : f32
    %13 = vector.broadcast %cst_11 : f32 to vector<8x128xf32>
    %14 = arith.maximumf %12, %13 : vector<8x128xf32>
    %c0_12 = arith.constant 0 : index
    %c0_13 = arith.constant 0 : index
    %15 = vector.load %arg6[%c0_12, %c0_13] : memref<128x128xf32, #tpu.memory_space<vmem>>, vector<128x128xf32>
    %cst_14 = arith.constant dense<0.000000e+00> : vector<8x128xf32>
    %16 = tpu.matmul %14, %15, %cst_14 {dimension_numbers = #tpu.dot_dimension_numbers<[1], [0], [0], [1], [0, 0, 1, 1], [], []>} : vector<8x128xf32>, vector<128x128xf32>, vector<8x128xf32> -> vector<8x128xf32>
    %c0_15 = arith.constant 0 : index
    %c0_16 = arith.constant 0 : index
    %17 = vector.load %arg7[%c0_15, %c0_16] : memref<1x128xf32, #tpu.memory_space<vmem>>, vector<1x128xf32>
    %18 = vector.broadcast %17 : vector<1x128xf32> to vector<8x128xf32>
    %19 = arith.addf %16, %18 : vector<8x128xf32>
    %c0_17 = arith.constant 0 : index
    %c0_18 = arith.constant 0 : index
    %20 = vector.load %arg8[%c0_17, %c0_18] : memref<8x128xf32, #tpu.memory_space<vmem>>, vector<8x128xf32>
    tpu.vector_store %arg8[%c0_17, %c0_18], %19 {strides = array<i32>} : memref<8x128xf32, #tpu.memory_space<vmem>>, vector<8x128xf32>,
    return
  }
  func.func @transform_0(%arg0: i32) -> (i32, i32) {
    %c0_i32 = arith.constant 0 : i32
    %c0_i32_0 = arith.constant 0 : i32
    return %arg0, %c0_i32 : i32, i32
  }
  func.func @transform_1(%arg0: i32) -> (i32, i32) {
    %c0_i32 = arith.constant 0 : i32
    %c0_i32_0 = arith.constant 0 : i32
    %c0_i32_1 = arith.constant 0 : i32
    return %c0_i32, %c0_i32_0 : i32, i32
  }
  func.func @transform_2(%arg0: i32) -> (i32, i32) {
    %c0_i32 = arith.constant 0 : i32
    %c0_i32_0 = arith.constant 0 : i32
    %c0_i32_1 = arith.constant 0 : i32
    return %c0_i32, %c0_i32_0 : i32, i32
  }
  func.func @transform_3(%arg0: i32) -> (i32, i32) {
    %c0_i32 = arith.constant 0 : i32
    %c0_i32_0 = arith.constant 0 : i32
    %c0_i32_1 = arith.constant 0 : i32
    return %c0_i32, %c0_i32_0 : i32, i32
  }
  func.func @transform_4(%arg0: i32) -> (i32, i32) {
    %c0_i32 = arith.constant 0 : i32
    %c0_i32_0 = arith.constant 0 : i32
    %c0_i32_1 = arith.constant 0 : i32
    return %c0_i32, %c0_i32_0 : i32, i32
  }
  func.func @transform_5(%arg0: i32) -> (i32, i32) {
    %c0_i32 = arith.constant 0 : i32
    %c0_i32_0 = arith.constant 0 : i32
    %c0_i32_1 = arith.constant 0 : i32
    return %c0_i32, %c0_i32_0 : i32, i32
  }
  func.func @transform_6(%arg0: i32) -> (i32, i32) {
    %c0_i32 = arith.constant 0 : i32
    %c0_i32_0 = arith.constant 0 : i32
    %c0_i32_1 = arith.constant 0 : i32
    return %c0_i32, %c0_i32_0 : i32, i32
  }
  func.func @transform_7(%arg0: i32) -> (i32, i32) {
    %c0_i32 = arith.constant 0 : i32
    %c0_i32_0 = arith.constant 0 : i32
    return %arg0, %c0_i32 : i32, i32
  }
}

</mosaic_0001>

<llo_original>
// kernel: tpu_custom_call.1
$region0: #{tpu_custom_call.1}
  #allocation0 [shape = 'u32[]', space=smem, size = 0x4, offset = 0x4, fixed_abs, tag = 'smem constant byte address 0x4 - core index']
  #allocation1 [shape = 'u32[144,128]{1,0:T(1,128)}', space=vmem, size = 0x12000, scoped, tag = 'internal scratch']
  %s0 = inlined_call_operand.hbm [shape: f32[8,128], index: 0, kind: input, shape index: {}]
  %s1 = inlined_call_operand.hbm [shape: f32[128,512], index: 1, kind: input, shape index: {}]
  %s2 = inlined_call_operand.vmem [shape: f32[1,512], index: 2, kind: input, shape index: {}]
  %s3 = inlined_call_operand.hbm [shape: f32[512,128], index: 3, kind: input, shape index: {}]
  %s4 = inlined_call_operand.vmem [shape: f32[1,128], index: 4, kind: input, shape index: {}]
  %s5 = inlined_call_operand.hbm [shape: f32[128,128], index: 5, kind: input, shape index: {}]
  %s6 = inlined_call_operand.vmem [shape: f32[1,128], index: 6, kind: input, shape index: {}]
  %s7 = inlined_call_operand.hbm [shape: f32[8,128], index: 7, kind: output, shape index: {}]
  %s8 = sld [smem:[#allocation0]]
  $region54: #{tpu_custom_call.1} parent=0
    _
  %s10 = ssub.s32 1, %s8
  %s11 = scalar_select 0, %s10, %s8
  $region1: #{tpu_custom_call.1} parent=0
    #allocation2 [shape = 'u8[4096]{0}', space=vmem, size = 0x1000, scoped, tag = 'input window, operand 0, single buffered']
    #allocation3 [shape = 's32[1]{0}', space=sflag, size = 0x4, scoped, tag = 'scoped memory for tpu_custom_call.1']
    #allocation4 [shape = 's32[1]{0}', space=sflag, size = 0x4, scoped, tag = 'scoped memory for tpu_custom_call.1']
    #allocation5 [shape = 'u8[262144]{0}', space=vmem, size = 0x40000, scoped, tag = 'input window, operand 1, single buffered']
    #allocation6 [shape = 's32[1]{0}', space=sflag, size = 0x4, scoped, tag = 'scoped memory for tpu_custom_call.1']
    #allocation7 [shape = 'u8[262144]{0}', space=vmem, size = 0x40000, scoped, tag = 'input window, operand 3, single buffered']
    #allocation8 [shape = 'u8[65536]{0}', space=vmem, size = 0x10000, scoped, tag = 'input window, operand 5, single buffered']
    #allocation9 [shape = 's32[1]{0}', space=sflag, size = 0x4, scoped, tag = 'scoped memory for tpu_custom_call.1']
    #allocation10 [shape = 'u8[4096]{0}', space=vmem, size = 0x1000, scoped, tag = 'output window, operand 0, single buffered']
    %12 = vsyncpa [#allocation3], 0
    %13 = vsyncpa [#allocation6], 0
    %14 = vsyncpa [#allocation9], 0
    %15 = vsyncpa [#allocation4], 0
    // Predicated region
    $region2: #{tpu_custom_call.1} parent=1 // pred_check
      _
    $region3: #{tpu_custom_call.1} parent=1 // pred_check_branch
      %17 = sbr.rel (0) target = $region5
    $region4: #{tpu_custom_call.1} parent=1 // pred_region
      %s19 = ssub.s32 128, 128
      %20 = vsyncadd [#allocation3], %s19
      %s22 = sshll.u32 [#allocation2], 4
      %s23 = int_to_ptr.vmem [resolvable:$true] %s22
      %25 = dma.hbm_to_vmem [thread:$0]  %s0, 128, %s23, [#allocation3]
    $region5: #{tpu_custom_call.1} parent=1 // pred_fallthru
      _
    // Predicated region
    $region6: #{tpu_custom_call.1} parent=1 // pred_check
      _
    $region7: #{tpu_custom_call.1} parent=1 // pred_check_branch
      %27 = sbr.rel (0) target = $region9
    $region8: #{tpu_custom_call.1} parent=1 // pred_region
      %s29 = ssub.s32 8192, 8192
      %30 = vsyncadd [#allocation6], %s29
      %s31 = sshll.u32 [#allocation5], 4
      %s32 = int_to_ptr.vmem [resolvable:$true] %s31
      %37 = dma.hbm_to_vmem [thread:$0]  %s1, 8192, %s32, [#allocation6], 512, 512, 32
    $region9: #{tpu_custom_call.1} parent=1 // pred_fallthru
      _
    // Predicated region
    $region10: #{tpu_custom_call.1} parent=1 // pred_check
      _
    $region11: #{tpu_custom_call.1} parent=1 // pred_check_branch
      %39 = sbr.rel (0) target = $region13
    $region12: #{tpu_custom_call.1} parent=1 // pred_region
      _
    $region13: #{tpu_custom_call.1} parent=1 // pred_fallthru
      _
    // Predicated region
    $region14: #{tpu_custom_call.1} parent=1 // pred_check
      _
    $region15: #{tpu_custom_call.1} parent=1 // pred_check_branch
      %41 = sbr.rel (0) target = $region17
    $region16: #{tpu_custom_call.1} parent=1 // pred_region
      %s43 = ssub.s32 8192, 8192
      %44 = vsyncadd [#allocation6], %s43
      %s45 = sshll.u32 [#allocation7], 4
      %s46 = int_to_ptr.vmem [resolvable:$true] %s45
      %51 = dma.hbm_to_vmem [thread:$0]  %s3, 8192, %s46, [#allocation6], 128, 128, 8
    $region17: #{tpu_custom_call.1} parent=1 // pred_fallthru
      _
    // Predicated region
    $region18: #{tpu_custom_call.1} parent=1 // pred_check
      _
    $region19: #{tpu_custom_call.1} parent=1 // pred_check_branch
      %53 = sbr.rel (0) target = $region21
    $region20: #{tpu_custom_call.1} parent=1 // pred_region
      _
    $region21: #{tpu_custom_call.1} parent=1 // pred_fallthru
      _
    // Predicated region
    $region22: #{tpu_custom_call.1} parent=1 // pred_check
      _
    $region23: #{tpu_custom_call.1} parent=1 // pred_check_branch
      %55 = sbr.rel (0) target = $region25
    $region24: #{tpu_custom_call.1} parent=1 // pred_region
      %s57 = ssub.s32 2048, 2048
      %58 = vsyncadd [#allocation9], %s57
      %s59 = sshll.u32 [#allocation8], 4
      %s60 = int_to_ptr.vmem [resolvable:$true] %s59
      %65 = dma.hbm_to_vmem [thread:$0]  %s5, 2048, %s60, [#allocation9], 128, 128, 8
    $region25: #{tpu_custom_call.1} parent=1 // pred_fallthru
      _
    // Predicated region
    $region26: #{tpu_custom_call.1} parent=1 // pred_check
      _
    $region27: #{tpu_custom_call.1} parent=1 // pred_check_branch
      %67 = sbr.rel (0) target = $region29
    $region28: #{tpu_custom_call.1} parent=1 // pred_region
      _
    $region29: #{tpu_custom_call.1} parent=1 // pred_fallthru
      _
    // Predicated region
    $region30: #{tpu_custom_call.1} parent=1 // pred_check
      _
    $region31: #{tpu_custom_call.1} parent=1 // pred_check_branch
      %69 = sbr.rel (0) target = $region33
    $region32: #{tpu_custom_call.1} parent=1 // pred_region
      %70 = dma.done [#allocation3], 128
    $region33: #{tpu_custom_call.1} parent=1 // pred_fallthru
      _
    // Predicated region
    $region34: #{tpu_custom_call.1} parent=1 // pred_check
      _
    $region35: #{tpu_custom_call.1} parent=1 // pred_check_branch
      %72 = sbr.rel (0) target = $region37
    $region36: #{tpu_custom_call.1} parent=1 // pred_region
      %73 = dma.done [#allocation6], 8192
    $region37: #{tpu_custom_call.1} parent=1 // pred_fallthru
      _
    // Predicated region
    $region38: #{tpu_custom_call.1} parent=1 // pred_check
      _
    $region39: #{tpu_custom_call.1} parent=1 // pred_check_branch
      %75 = sbr.rel (0) target = $region41
    $region40: #{tpu_custom_call.1} parent=1 // pred_region
      %76 = dma.done [#allocation6], 8192
    $region41: #{tpu_custom_call.1} parent=1 // pred_fallthru
      _
    // Predicated region
    $region42: #{tpu_custom_call.1} parent=1 // pred_check
      _
    $region43: #{tpu_custom_call.1} parent=1 // pred_check_branch
      %78 = sbr.rel (0) target = $region45
    $region44: #{tpu_custom_call.1} parent=1 // pred_region
      %79 = dma.done [#allocation9], 2048
    $region45: #{tpu_custom_call.1} parent=1 // pred_fallthru
      _
    %v80 = vld [vmem:[#allocation2] sm:$0xff]
    %v81 = vld [vmem:[#allocation5] sm:$0xff]
    %v82 = vld [vmem:[#allocation5 + $0x8] sm:$0xff]
    %v83 = vld [vmem:[#allocation5 + $0x10] sm:$0xff]
    %v84 = vld [vmem:[#allocation5 + $0x18] sm:$0xff]
    %v85 = vld [vmem:[#allocation5 + $0x20] sm:$0xff]
    %v86 = vld [vmem:[#allocation5 + $0x28] sm:$0xff]
    %v87 = vld [vmem:[#allocation5 + $0x30] sm:$0xff]
    %v88 = vld [vmem:[#allocation5 + $0x38] sm:$0xff]
    %v89 = vld [vmem:[#allocation5 + $0x40] sm:$0xff]
    %v90 = vld [vmem:[#allocation5 + $0x48] sm:$0xff]
    %v91 = vld [vmem:[#allocation5 + $0x50] sm:$0xff]
    %v92 = vld [vmem:[#allocation5 + $0x58] sm:$0xff]
    %v93 = vld [vmem:[#allocation5 + $0x60] sm:$0xff]
    %v94 = vld [vmem:[#allocation5 + $0x68] sm:$0xff]
    %v95 = vld [vmem:[#allocation5 + $0x70] sm:$0xff]
    %v96 = vld [vmem:[#allocation5 + $0x78] sm:$0xff]
    %v97 = vld [vmem:[#allocation5 + $0x80] sm:$0xff]
    %v98 = vld [vmem:[#allocation5 + $0x88] sm:$0xff]
    %v99 = vld [vmem:[#allocation5 + $0x90] sm:$0xff]
    %v100 = vld [vmem:[#allocation5 + $0x98] sm:$0xff]
    %v101 = vld [vmem:[#allocation5 + $0xa0] sm:$0xff]
    %v102 = vld [vmem:[#allocation5 + $0xa8] sm:$0xff]
    %v103 = vld [vmem:[#allocation5 + $0xb0] sm:$0xff]
    %v104 = vld [vmem:[#allocation5 + $0xb8] sm:$0xff]
    %v105 = vld [vmem:[#allocation5 + $0xc0] sm:$0xff]
    %v106 = vld [vmem:[#allocation5 + $0xc8] sm:$0xff]
    %v107 = vld [vmem:[#allocation5 + $0xd0] sm:$0xff]
    %v108 = vld [vmem:[#allocation5 + $0xd8] sm:$0xff]
    %v109 = vld [vmem:[#allocation5 + $0xe0] sm:$0xff]
    %v110 = vld [vmem:[#allocation5 + $0xe8] sm:$0xff]
    %v111 = vld [vmem:[#allocation5 + $0xf0] sm:$0xff]
    %v112 = vld [vmem:[#allocation5 + $0xf8] sm:$0xff]
    %v113 = vld [vmem:[#allocation5 + $0x100] sm:$0xff]
    %v114 = vld [vmem:[#allocation5 + $0x108] sm:$0xff]
    %v115 = vld [vmem:[#allocation5 + $0x110] sm:$0xff]
    %v116 = vld [vmem:[#allocation5 + $0x118] sm:$0xff]
    %v117 = vld [vmem:[#allocation5 + $0x120] sm:$0xff]
    %v118 = vld [vmem:[#allocation5 + $0x128] sm:$0xff]
    %v119 = vld [vmem:[#allocation5 + $0x130] sm:$0xff]
    %v120 = vld [vmem:[#allocation5 + $0x138] sm:$0xff]
    %v121 = vld [vmem:[#allocation5 + $0x140] sm:$0xff]
    %v122 = vld [vmem:[#allocation5 + $0x148] sm:$0xff]
    %v123 = vld [vmem:[#allocation5 + $0x150] sm:$0xff]
    %v124 = vld [vmem:[#allocation5 + $0x158] sm:$0xff]
    %v125 = vld [vmem:[#allocation5 + $0x160] sm:$0xff]
    %v126 = vld [vmem:[#allocation5 + $0x168] sm:$0xff]
    %v127 = vld [vmem:[#allocation5 + $0x170] sm:$0xff]
    %v128 = vld [vmem:[#allocation5 + $0x178] sm:$0xff]
    %v129 = vld [vmem:[#allocation5 + $0x180] sm:$0xff]
    %v130 = vld [vmem:[#allocation5 + $0x188] sm:$0xff]
    %v131 = vld [vmem:[#allocation5 + $0x190] sm:$0xff]
    %v132 = vld [vmem:[#allocation5 + $0x198] sm:$0xff]
    %v133 = vld [vmem:[#allocation5 + $0x1a0] sm:$0xff]
    %v134 = vld [vmem:[#allocation5 + $0x1a8] sm:$0xff]
    %v135 = vld [vmem:[#allocation5 + $0x1b0] sm:$0xff]
    %v136 = vld [vmem:[#allocation5 + $0x1b8] sm:$0xff]
    %v137 = vld [vmem:[#allocation5 + $0x1c0] sm:$0xff]
    %v138 = vld [vmem:[#allocation5 + $0x1c8] sm:$0xff]
    %v139 = vld [vmem:[#allocation5 + $0x1d0] sm:$0xff]
    %v140 = vld [vmem:[#allocation5 + $0x1d8] sm:$0xff]
    %v141 = vld [vmem:[#allocation5 + $0x1e0] sm:$0xff]
    %v142 = vld [vmem:[#allocation5 + $0x1e8] sm:$0xff]
    %v143 = vld [vmem:[#allocation5 + $0x1f0] sm:$0xff]
    %v144 = vld [vmem:[#allocation5 + $0x1f8] sm:$0xff]
    %v145 = vld [vmem:[%s2] sm:$0xf]
    %v147 = vlaneseq
    %v148 = vshrl.u32 %v147, 7
    %v149 = vsub.s32 0, %v148
    %v150 = vrot.slane %v145, %v149
    %v151 = vlaneseq
    %v152 = vshrl.u32 %v151, 7
    %v153 = vsub.s32 1, %v152
    %v154 = vrot.slane %v145, %v153
    %v155 = vlaneseq
    %v156 = vshrl.u32 %v155, 7
    %v157 = vsub.s32 2, %v156
    %v158 = vrot.slane %v145, %v157
    %v159 = vlaneseq
    %v160 = vshrl.u32 %v159, 7
    %v161 = vsub.s32 3, %v160
    %v162 = vrot.slane %v145, %v161
    %167 = vmatprep.subr.mxu0 %v82
    %168 = vmatpush1.msra.mxu0 %v81
    %169 = vmatprep.subr.mxu0 %v86
    %170 = vmatpush1.msra.mxu0 %v85
    %171 = vmatprep.subr.mxu0 %v90
    %172 = vmatpush1.msra.mxu0 %v89
    %173 = vmatprep.subr.mxu0 %v94
    %174 = vmatpush1.msra.mxu0 %v93
    %175 = vmatprep.subr.mxu0 %v98
    %176 = vmatpush1.msra.mxu0 %v97
    %177 = vmatprep.subr.mxu0 %v102
    %178 = vmatpush1.msra.mxu0 %v101
    %179 = vmatprep.subr.mxu0 %v106
    %180 = vmatpush1.msra.mxu0 %v105
    %181 = vmatprep.subr.mxu0 %v110
    %182 = vmatpush1.msra.mxu0 %v109
    %183 = vmatprep.subr.mxu0 %v114
    %184 = vmatpush1.msra.mxu0 %v113
    %185 = vmatprep.subr.mxu0 %v118
    %186 = vmatpush1.msra.mxu0 %v117
    %187 = vmatprep.subr.mxu0 %v122
    %188 = vmatpush1.msra.mxu0 %v121
    %189 = vmatprep.subr.mxu0 %v126
    %190 = vmatpush1.msra.mxu0 %v125
    %191 = vmatprep.subr.mxu0 %v130
    %192 = vmatpush1.msra.mxu0 %v129
    %193 = vmatprep.subr.mxu0 %v134
    %194 = vmatpush1.msra.mxu0 %v133
    %195 = vmatprep.subr.mxu0 %v138
    %196 = vmatpush1.msra.mxu0 %v137
    %197 = vmatprep.subr.mxu0 %v142
    %198 = vmatpush1.msra.mxu0 %v141
    %199 = vmatprep.subr.mxu0 0.0
    %200 = vmatpush1.msra.mxu0 0.0
    %201 = vmatprep.subr.mxu0 0.0
    %202 = vmatpush1.msra.mxu0 0.0
    %203 = vmatprep.subr.mxu0 0.0
    %204 = vmatpush1.msra.mxu0 0.0
    %205 = vmatprep.subr.mxu0 0.0
    %206 = vmatpush1.msra.mxu0 0.0
    %207 = vmatprep.subr.mxu0 0.0
    %208 = vmatpush1.msra.mxu0 0.0
    %209 = vmatprep.subr.mxu0 0.0
    %210 = vmatpush1.msra.mxu0 0.0
    %211 = vmatprep.subr.mxu0 0.0
    %212 = vmatpush1.msra.mxu0 0.0
    %213 = vmatprep.subr.mxu0 0.0
    %214 = vmatpush1.msra.mxu0 0.0
    %215 = vmatprep.subr.mxu0 0.0
    %216 = vmatpush1.msra.mxu0 0.0
    %217 = vmatprep.subr.mxu0 0.0
    %218 = vmatpush1.msra.mxu0 0.0
    %219 = vmatprep.subr.mxu0 0.0
    %220 = vmatpush1.msra.mxu0 0.0
    %221 = vmatprep.subr.mxu0 0.0
    %222 = vmatpush1.msra.mxu0 0.0
    %223 = vmatprep.subr.mxu0 0.0
    %224 = vmatpush1.msra.mxu0 0.0
    %225 = vmatprep.subr.mxu0 0.0
    %226 = vmatpush1.msra.mxu0 0.0
    %227 = vmatprep.subr.mxu0 0.0
    %228 = vmatpush1.msra.mxu0 0.0
    %229 = vmatprep.subr.mxu0 0.0
    %230 = vmatpush1.msra.mxu0 0.0
    %231 = vmatprep.mubr.f32.mxu0 0.0
    %232 = vmatmul.mubr.f32.gmra.mrb[0].mxu0 %v80
    %v233 = vpop.f32.mrb[0].mxu0
    %v234 = vadd.f32 %v150, %v233
    %v235 = vpop.f32.mrb[0].mxu0
    %v236 = vadd.f32 %v154, %v235
    %237 = vdwg.mxu0
    %238 = vmatprep.subr.mxu0 %v84
    %239 = vmatpush1.msra.mxu0 %v83
    %240 = vmatprep.subr.mxu0 %v88
    %241 = vmatpush1.msra.mxu0 %v87
    %242 = vmatprep.subr.mxu0 %v92
    %243 = vmatpush1.msra.mxu0 %v91
    %244 = vmatprep.subr.mxu0 %v96
    %245 = vmatpush1.msra.mxu0 %v95
    %246 = vmatprep.subr.mxu0 %v100
    %247 = vmatpush1.msra.mxu0 %v99
    %248 = vmatprep.subr.mxu0 %v104
    %249 = vmatpush1.msra.mxu0 %v103
    %250 = vmatprep.subr.mxu0 %v108
    %251 = vmatpush1.msra.mxu0 %v107
    %252 = vmatprep.subr.mxu0 %v112
    %253 = vmatpush1.msra.mxu0 %v111
    %254 = vmatprep.subr.mxu0 %v116
    %255 = vmatpush1.msra.mxu0 %v115
    %256 = vmatprep.subr.mxu0 %v120
    %257 = vmatpush1.msra.mxu0 %v119
    %258 = vmatprep.subr.mxu0 %v124
    %259 = vmatpush1.msra.mxu0 %v123
    %260 = vmatprep.subr.mxu0 %v128
    %261 = vmatpush1.msra.mxu0 %v127
    %262 = vmatprep.subr.mxu0 %v132
    %263 = vmatpush1.msra.mxu0 %v131
    %264 = vmatprep.subr.mxu0 %v136
    %265 = vmatpush1.msra.mxu0 %v135
    %266 = vmatprep.subr.mxu0 %v140
    %267 = vmatpush1.msra.mxu0 %v139
    %268 = vmatprep.subr.mxu0 %v144
    %269 = vmatpush1.msra.mxu0 %v143
    %270 = vmatprep.subr.mxu0 0.0
    %271 = vmatpush1.msra.mxu0 0.0
    %272 = vmatprep.subr.mxu0 0.0
    %273 = vmatpush1.msra.mxu0 0.0
    %274 = vmatprep.subr.mxu0 0.0
    %275 = vmatpush1.msra.mxu0 0.0
    %276 = vmatprep.subr.mxu0 0.0
    %277 = vmatpush1.msra.mxu0 0.0
    %278 = vmatprep.subr.mxu0 0.0
    %279 = vmatpush1.msra.mxu0 0.0
    %280 = vmatprep.subr.mxu0 0.0
    %281 = vmatpush1.msra.mxu0 0.0
    %282 = vmatprep.subr.mxu0 0.0
    %283 = vmatpush1.msra.mxu0 0.0
    %284 = vmatprep.subr.mxu0 0.0
    %285 = vmatpush1.msra.mxu0 0.0
    %286 = vmatprep.subr.mxu0 0.0
    %287 = vmatpush1.msra.mxu0 0.0
    %288 = vmatprep.subr.mxu0 0.0
    %289 = vmatpush1.msra.mxu0 0.0
    %290 = vmatprep.subr.mxu0 0.0
    %291 = vmatpush1.msra.mxu0 0.0
    %292 = vmatprep.subr.mxu0 0.0
    %293 = vmatpush1.msra.mxu0 0.0
    %294 = vmatprep.subr.mxu0 0.0
    %295 = vmatpush1.msra.mxu0 0.0
    %296 = vmatprep.subr.mxu0 0.0
    %297 = vmatpush1.msra.mxu0 0.0
    %298 = vmatprep.subr.mxu0 0.0
    %299 = vmatpush1.msra.mxu0 0.0
    %300 = vmatprep.subr.mxu0 0.0
    %301 = vmatpush1.msra.mxu0 0.0
    %302 = vmatprep.mubr.f32.mxu0 0.0
    %303 = vmatmul.mubr.f32.gmra.mrb[0].mxu0 %v80
    %v304 = vpop.f32.mrb[0].mxu0
    %v305 = vadd.f32 %v158, %v304
    %v306 = vpop.f32.mrb[0].mxu0
    %v307 = vadd.f32 %v162, %v306
    %308 = vdwg.mxu0
    %v309 = vmax.f32 %v234, 0.0
    %v310 = vmax.f32 %v236, 0.0
    %v311 = vmax.f32 %v305, 0.0
    %v312 = vmax.f32 %v307, 0.0
    %v313 = vld [vmem:[#allocation7] sm:$0xff]
    %v314 = vld [vmem:[#allocation7 + $0x8] sm:$0xff]
    %v315 = vld [vmem:[#allocation7 + $0x10] sm:$0xff]
    %v316 = vld [vmem:[#allocation7 + $0x18] sm:$0xff]
    %v317 = vld [vmem:[#allocation7 + $0x20] sm:$0xff]
    %v318 = vld [vmem:[#allocation7 + $0x28] sm:$0xff]
    %v319 = vld [vmem:[#allocation7 + $0x30] sm:$0xff]
    %v320 = vld [vmem:[#allocation7 + $0x38] sm:$0xff]
    %v321 = vld [vmem:[#allocation7 + $0x40] sm:$0xff]
    %v322 = vld [vmem:[#allocation7 + $0x48] sm:$0xff]
    %v323 = vld [vmem:[#allocation7 + $0x50] sm:$0xff]
    %v324 = vld [vmem:[#allocation7 + $0x58] sm:$0xff]
    %v325 = vld [vmem:[#allocation7 + $0x60] sm:$0xff]
    %v326 = vld [vmem:[#allocation7 + $0x68] sm:$0xff]
    %v327 = vld [vmem:[#allocation7 + $0x70] sm:$0xff]
    %v328 = vld [vmem:[#allocation7 + $0x78] sm:$0xff]
    %v329 = vld [vmem:[#allocation7 + $0x80] sm:$0xff]
    %v330 = vld [vmem:[#allocation7 + $0x88] sm:$0xff]
    %v331 = vld [vmem:[#allocation7 + $0x90] sm:$0xff]
    %v332 = vld [vmem:[#allocation7 + $0x98] sm:$0xff]
    %v333 = vld [vmem:[#allocation7 + $0xa0] sm:$0xff]
    %v334 = vld [vmem:[#allocation7 + $0xa8] sm:$0xff]
    %v335 = vld [vmem:[#allocation7 + $0xb0] sm:$0xff]
    %v336 = vld [vmem:[#allocation7 + $0xb8] sm:$0xff]
    %v337 = vld [vmem:[#allocation7 + $0xc0] sm:$0xff]
    %v338 = vld [vmem:[#allocation7 + $0xc8] sm:$0xff]
    %v339 = vld [vmem:[#allocation7 + $0xd0] sm:$0xff]
    %v340 = vld [vmem:[#allocation7 + $0xd8] sm:$0xff]
    %v341 = vld [vmem:[#allocation7 + $0xe0] sm:$0xff]
    %v342 = vld [vmem:[#allocation7 + $0xe8] sm:$0xff]
    %v343 = vld [vmem:[#allocation7 + $0xf0] sm:$0xff]
    %v344 = vld [vmem:[#allocation7 + $0xf8] sm:$0xff]
    %v345 = vld [vmem:[#allocation7 + $0x100] sm:$0xff]
    %v346 = vld [vmem:[#allocation7 + $0x108] sm:$0xff]
    %v347 = vld [vmem:[#allocation7 + $0x110] sm:$0xff]
    %v348 = vld [vmem:[#allocation7 + $0x118] sm:$0xff]
    %v349 = vld [vmem:[#allocation7 + $0x120] sm:$0xff]
    %v350 = vld [vmem:[#allocation7 + $0x128] sm:$0xff]
    %v351 = vld [vmem:[#allocation7 + $0x130] sm:$0xff]
    %v352 = vld [vmem:[#allocation7 + $0x138] sm:$0xff]
    %v353 = vld [vmem:[#allocation7 + $0x140] sm:$0xff]
    %v354 = vld [vmem:[#allocation7 + $0x148] sm:$0xff]
    %v355 = vld [vmem:[#allocation7 + $0x150] sm:$0xff]
    %v356 = vld [vmem:[#allocation7 + $0x158] sm:$0xff]
    %v357 = vld [vmem:[#allocation7 + $0x160] sm:$0xff]
    %v358 = vld [vmem:[#allocation7 + $0x168] sm:$0xff]
    %v359 = vld [vmem:[#allocation7 + $0x170] sm:$0xff]
    %v360 = vld [vmem:[#allocation7 + $0x178] sm:$0xff]
    %v361 = vld [vmem:[#allocation7 + $0x180] sm:$0xff]
    %v362 = vld [vmem:[#allocation7 + $0x188] sm:$0xff]
    %v363 = vld [vmem:[#allocation7 + $0x190] sm:$0xff]
    %v364 = vld [vmem:[#allocation7 + $0x198] sm:$0xff]
    %v365 = vld [vmem:[#allocation7 + $0x1a0] sm:$0xff]
    %v366 = vld [vmem:[#allocation7 + $0x1a8] sm:$0xff]
    %v367 = vld [vmem:[#allocation7 + $0x1b0] sm:$0xff]
    %v368 = vld [vmem:[#allocation7 + $0x1b8] sm:$0xff]
    %v369 = vld [vmem:[#allocation7 + $0x1c0] sm:$0xff]
    %v370 = vld [vmem:[#allocation7 + $0x1c8] sm:$0xff]
    %v371 = vld [vmem:[#allocation7 + $0x1d0] sm:$0xff]
    %v372 = vld [vmem:[#allocation7 + $0x1d8] sm:$0xff]
    %v373 = vld [vmem:[#allocation7 + $0x1e0] sm:$0xff]
    %v374 = vld [vmem:[#allocation7 + $0x1e8] sm:$0xff]
    %v375 = vld [vmem:[#allocation7 + $0x1f0] sm:$0xff]
    %v376 = vld [vmem:[#allocation7 + $0x1f8] sm:$0xff]
    %v377 = vld [vmem:[%s4] sm:$0x1]
    %v379 = vlaneseq
    %v380 = vshrl.u32 %v379, 7
    %v381 = vsub.s32 0, %v380
    %v382 = vrot.slane %v377, %v381
    %384 = vmatprep.subr.mxu0 0.0
    %385 = vmatpush1.msra.mxu0 %v313
    %386 = vmatprep.subr.mxu0 0.0
    %387 = vmatpush1.msra.mxu0 %v314
    %388 = vmatprep.subr.mxu0 0.0
    %389 = vmatpush1.msra.mxu0 %v315
    %390 = vmatprep.subr.mxu0 0.0
    %391 = vmatpush1.msra.mxu0 %v316
    %392 = vmatprep.subr.mxu0 0.0
    %393 = vmatpush1.msra.mxu0 %v317
    %394 = vmatprep.subr.mxu0 0.0
    %395 = vmatpush1.msra.mxu0 %v318
    %396 = vmatprep.subr.mxu0 0.0
    %397 = vmatpush1.msra.mxu0 %v319
    %398 = vmatprep.subr.mxu0 0.0
    %399 = vmatpush1.msra.mxu0 %v320
    %400 = vmatprep.subr.mxu0 0.0
    %401 = vmatpush1.msra.mxu0 %v321
    %402 = vmatprep.subr.mxu0 0.0
    %403 = vmatpush1.msra.mxu0 %v322
    %404 = vmatprep.subr.mxu0 0.0
    %405 = vmatpush1.msra.mxu0 %v323
    %406 = vmatprep.subr.mxu0 0.0
    %407 = vmatpush1.msra.mxu0 %v324
    %408 = vmatprep.subr.mxu0 0.0
    %409 = vmatpush1.msra.mxu0 %v325
    %410 = vmatprep.subr.mxu0 0.0
    %411 = vmatpush1.msra.mxu0 %v326
    %412 = vmatprep.subr.mxu0 0.0
    %413 = vmatpush1.msra.mxu0 %v327
    %414 = vmatprep.subr.mxu0 0.0
    %415 = vmatpush1.msra.mxu0 %v328
    %416 = vmatprep.subr.mxu0 0.0
    %417 = vmatpush1.msra.mxu0 %v329
    %418 = vmatprep.subr.mxu0 0.0
    %419 = vmatpush1.msra.mxu0 %v330
    %420 = vmatprep.subr.mxu0 0.0
    %421 = vmatpush1.msra.mxu0 %v331
    %422 = vmatprep.subr.mxu0 0.0
    %423 = vmatpush1.msra.mxu0 %v332
    %424 = vmatprep.subr.mxu0 0.0
    %425 = vmatpush1.msra.mxu0 %v333
    %426 = vmatprep.subr.mxu0 0.0
    %427 = vmatpush1.msra.mxu0 %v334
    %428 = vmatprep.subr.mxu0 0.0
    %429 = vmatpush1.msra.mxu0 %v335
    %430 = vmatprep.subr.mxu0 0.0
    %431 = vmatpush1.msra.mxu0 %v336
    %432 = vmatprep.subr.mxu0 0.0
    %433 = vmatpush1.msra.mxu0 %v337
    %434 = vmatprep.subr.mxu0 0.0
    %435 = vmatpush1.msra.mxu0 %v338
    %436 = vmatprep.subr.mxu0 0.0
    %437 = vmatpush1.msra.mxu0 %v339
    %438 = vmatprep.subr.mxu0 0.0
    %439 = vmatpush1.msra.mxu0 %v340
    %440 = vmatprep.subr.mxu0 0.0
    %441 = vmatpush1.msra.mxu0 %v341
    %442 = vmatprep.subr.mxu0 0.0
    %443 = vmatpush1.msra.mxu0 %v342
    %444 = vmatprep.subr.mxu0 0.0
    %445 = vmatpush1.msra.mxu0 %v343
    %446 = vmatprep.subr.mxu0 0.0
    %447 = vmatpush1.msra.mxu0 %v344
    %448 = vmatprep.mubr.f32.mxu0 %v310
    %449 = vmatmul.mubr.f32.gmra.mrb[0].mxu0 %v309
    %v450 = vpop.f32.mrb[0].mxu0
    %v451 = vadd.f32 %v382, %v450
    %v452 = vpop.f32.mrb[0].mxu0
    %453 = vdwg.mxu0
    %454 = vmatprep.subr.mxu0 0.0
    %455 = vmatpush1.msra.mxu0 %v345
    %456 = vmatprep.subr.mxu0 0.0
    %457 = vmatpush1.msra.mxu0 %v346
    %458 = vmatprep.subr.mxu0 0.0
    %459 = vmatpush1.msra.mxu0 %v347
    %460 = vmatprep.subr.mxu0 0.0
    %461 = vmatpush1.msra.mxu0 %v348
    %462 = vmatprep.subr.mxu0 0.0
    %463 = vmatpush1.msra.mxu0 %v349
    %464 = vmatprep.subr.mxu0 0.0
    %465 = vmatpush1.msra.mxu0 %v350
    %466 = vmatprep.subr.mxu0 0.0
    %467 = vmatpush1.msra.mxu0 %v351
    %468 = vmatprep.subr.mxu0 0.0
    %469 = vmatpush1.msra.mxu0 %v352
    %470 = vmatprep.subr.mxu0 0.0
    %471 = vmatpush1.msra.mxu0 %v353
    %472 = vmatprep.subr.mxu0 0.0
    %473 = vmatpush1.msra.mxu0 %v354
    %474 = vmatprep.subr.mxu0 0.0
    %475 = vmatpush1.msra.mxu0 %v355
    %476 = vmatprep.subr.mxu0 0.0
    %477 = vmatpush1.msra.mxu0 %v356
    %478 = vmatprep.subr.mxu0 0.0
    %479 = vmatpush1.msra.mxu0 %v357
    %480 = vmatprep.subr.mxu0 0.0
    %481 = vmatpush1.msra.mxu0 %v358
    %482 = vmatprep.subr.mxu0 0.0
    %483 = vmatpush1.msra.mxu0 %v359
    %484 = vmatprep.subr.mxu0 0.0
    %485 = vmatpush1.msra.mxu0 %v360
    %486 = vmatprep.subr.mxu0 0.0
    %487 = vmatpush1.msra.mxu0 %v361
    %488 = vmatprep.subr.mxu0 0.0
    %489 = vmatpush1.msra.mxu0 %v362
    %490 = vmatprep.subr.mxu0 0.0
    %491 = vmatpush1.msra.mxu0 %v363
    %492 = vmatprep.subr.mxu0 0.0
    %493 = vmatpush1.msra.mxu0 %v364
    %494 = vmatprep.subr.mxu0 0.0
    %495 = vmatpush1.msra.mxu0 %v365
    %496 = vmatprep.subr.mxu0 0.0
    %497 = vmatpush1.msra.mxu0 %v366
    %498 = vmatprep.subr.mxu0 0.0
    %499 = vmatpush1.msra.mxu0 %v367
    %500 = vmatprep.subr.mxu0 0.0
    %501 = vmatpush1.msra.mxu0 %v368
    %502 = vmatprep.subr.mxu0 0.0
    %503 = vmatpush1.msra.mxu0 %v369
    %504 = vmatprep.subr.mxu0 0.0
    %505 = vmatpush1.msra.mxu0 %v370
    %506 = vmatprep.subr.mxu0 0.0
    %507 = vmatpush1.msra.mxu0 %v371
    %508 = vmatprep.subr.mxu0 0.0
    %509 = vmatpush1.msra.mxu0 %v372
    %510 = vmatprep.subr.mxu0 0.0
    %511 = vmatpush1.msra.mxu0 %v373
    %512 = vmatprep.subr.mxu0 0.0
    %513 = vmatpush1.msra.mxu0 %v374
    %514 = vmatprep.subr.mxu0 0.0
    %515 = vmatpush1.msra.mxu0 %v375
    %516 = vmatprep.subr.mxu0 0.0
    %517 = vmatpush1.msra.mxu0 %v376
    %518 = vmatprep.mubr.f32.mxu0 %v312
    %519 = vmatmul.mubr.f32.gmra.mrb[0].mxu0 %v311
    %v520 = vpop.f32.mrb[0].mxu0
    %v521 = vadd.f32 %v451, %v520
    %v522 = vpop.f32.mrb[0].mxu0
    %523 = vdwg.mxu0
    %v524 = vmax.f32 %v521, 0.0
    %v525 = vld [vmem:[#allocation8] sm:$0xff]
    %v526 = vld [vmem:[#allocation8 + $0x8] sm:$0xff]
    %v527 = vld [vmem:[#allocation8 + $0x10] sm:$0xff]
    %v528 = vld [vmem:[#allocation8 + $0x18] sm:$0xff]
    %v529 = vld [vmem:[#allocation8 + $0x20] sm:$0xff]
    %v530 = vld [vmem:[#allocation8 + $0x28] sm:$0xff]
    %v531 = vld [vmem:[#allocation8 + $0x30] sm:$0xff]
    %v532 = vld [vmem:[#allocation8 + $0x38] sm:$0xff]
    %v533 = vld [vmem:[#allocation8 + $0x40] sm:$0xff]
    %v534 = vld [vmem:[#allocation8 + $0x48] sm:$0xff]
    %v535 = vld [vmem:[#allocation8 + $0x50] sm:$0xff]
    %v536 = vld [vmem:[#allocation8 + $0x58] sm:$0xff]
    %v537 = vld [vmem:[#allocation8 + $0x60] sm:$0xff]
    %v538 = vld [vmem:[#allocation8 + $0x68] sm:$0xff]
    %v539 = vld [vmem:[#allocation8 + $0x70] sm:$0xff]
    %v540 = vld [vmem:[#allocation8 + $0x78] sm:$0xff]
    %v541 = vld [vmem:[%s6] sm:$0x1]
    %v543 = vlaneseq
    %v544 = vshrl.u32 %v543, 7
    %v545 = vsub.s32 0, %v544
    %v546 = vrot.slane %v541, %v545
    %548 = vmatprep.subr.mxu0 0.0
    %549 = vmatpush1.msra.mxu0 %v525
    %550 = vmatprep.subr.mxu0 0.0
    %551 = vmatpush1.msra.mxu0 %v526
    %552 = vmatprep.subr.mxu0 0.0
    %553 = vmatpush1.msra.mxu0 %v527
    %554 = vmatprep.subr.mxu0 0.0
    %555 = vmatpush1.msra.mxu0 %v528
    %556 = vmatprep.subr.mxu0 0.0
    %557 = vmatpush1.msra.mxu0 %v529
    %558 = vmatprep.subr.mxu0 0.0
    %559 = vmatpush1.msra.mxu0 %v530
    %560 = vmatprep.subr.mxu0 0.0
    %561 = vmatpush1.msra.mxu0 %v531
    %562 = vmatprep.subr.mxu0 0.0
    %563 = vmatpush1.msra.mxu0 %v532
    %564 = vmatprep.subr.mxu0 0.0
    %565 = vmatpush1.msra.mxu0 %v533
    %566 = vmatprep.subr.mxu0 0.0
    %567 = vmatpush1.msra.mxu0 %v534
    %568 = vmatprep.subr.mxu0 0.0
    %569 = vmatpush1.msra.mxu0 %v535
    %570 = vmatprep.subr.mxu0 0.0
    %571 = vmatpush1.msra.mxu0 %v536
    %572 = vmatprep.subr.mxu0 0.0
    %573 = vmatpush1.msra.mxu0 %v537
    %574 = vmatprep.subr.mxu0 0.0
    %575 = vmatpush1.msra.mxu0 %v538
    %576 = vmatprep.subr.mxu0 0.0
    %577 = vmatpush1.msra.mxu0 %v539
    %578 = vmatprep.subr.mxu0 0.0
    %579 = vmatpush1.msra.mxu0 %v540
    %580 = vmatprep.subr.mxu0 0.0
    %581 = vmatpush1.msra.mxu0 0.0
    %582 = vmatprep.subr.mxu0 0.0
    %583 = vmatpush1.msra.mxu0 0.0
    %584 = vmatprep.subr.mxu0 0.0
    %585 = vmatpush1.msra.mxu0 0.0
    %586 = vmatprep.subr.mxu0 0.0
    %587 = vmatpush1.msra.mxu0 0.0
    %588 = vmatprep.subr.mxu0 0.0
    %589 = vmatpush1.msra.mxu0 0.0
    %590 = vmatprep.subr.mxu0 0.0
    %591 = vmatpush1.msra.mxu0 0.0
    %592 = vmatprep.subr.mxu0 0.0
    %593 = vmatpush1.msra.mxu0 0.0
    %594 = vmatprep.subr.mxu0 0.0
    %595 = vmatpush1.msra.mxu0 0.0
    %596 = vmatprep.subr.mxu0 0.0
    %597 = vmatpush1.msra.mxu0 0.0
    %598 = vmatprep.subr.mxu0 0.0
    %599 = vmatpush1.msra.mxu0 0.0
    %600 = vmatprep.subr.mxu0 0.0
    %601 = vmatpush1.msra.mxu0 0.0
    %602 = vmatprep.subr.mxu0 0.0
    %603 = vmatpush1.msra.mxu0 0.0
    %604 = vmatprep.subr.mxu0 0.0
    %605 = vmatpush1.msra.mxu0 0.0
    %606 = vmatprep.subr.mxu0 0.0
    %607 = vmatpush1.msra.mxu0 0.0
    %608 = vmatprep.subr.mxu0 0.0
    %609 = vmatpush1.msra.mxu0 0.0
    %610 = vmatprep.subr.mxu0 0.0
    %611 = vmatpush1.msra.mxu0 0.0
    %612 = vmatprep.mubr.f32.mxu0 0.0
    %613 = vmatmul.mubr.f32.gmra.mrb[0].mxu0 %v524
    %v614 = vpop.f32.mrb[0].mxu0
    %v615 = vadd.f32 %v546, %v614
    %v616 = vpop.f32.mrb[0].mxu0
    %617 = vdwg.mxu0
    %618 = vst [vmem:[#allocation10] sm:$0xff] %v615
    // Predicated region
    $region46: #{tpu_custom_call.1} parent=1 // pred_check
      _
    $region47: #{tpu_custom_call.1} parent=1 // pred_check_branch
      %620 = sbr.rel (0) target = $region49
    $region48: #{tpu_custom_call.1} parent=1 // pred_region
      %s622 = ssub.s32 128, 128
      %623 = vsyncadd [#allocation4], %s622
      %s625 = sshll.u32 [#allocation10], 4
      %s626 = int_to_ptr.vmem [resolvable:$true] %s625
      %628 = dma.vmem_to_hbm [thread:$0]  %s626, 128, %s7, [#allocation4]
    $region49: #{tpu_custom_call.1} parent=1 // pred_fallthru
      _
    // Predicated region
    $region50: #{tpu_custom_call.1} parent=1 // pred_check
      _
    $region51: #{tpu_custom_call.1} parent=1 // pred_check_branch
      %630 = sbr.rel (0) target = $region53
    $region52: #{tpu_custom_call.1} parent=1 // pred_region
      %631 = dma.done [#allocation4], 128
    $region53: #{tpu_custom_call.1} parent=1 // pred_fallthru
      _
    %632 = vsyncpa [#allocation3], 1
    %633 = vsyncpa [#allocation6], 1
    %634 = vsyncpa [#allocation9], 1
    %635 = vsyncpa [#allocation4], 1

</llo_original>
